<compile_context>
chip_gen: v6e
topology: v6e:2x2x1
jax: 0.10.0
libtpu: 0.0.40
codegen_flags: <defaults>
</compile_context>

<pallas_src>
import functools

import jax
import jax.numpy as jnp
from jax.experimental import pallas as pl
from jax.experimental.pallas import tpu as pltpu

NUM_INPUTS = 128
NUM_HIDDENS = 128
NUM_OUTPUTS = 10
BATCH = 64


def _round_up(n, m):
    return ((n + m - 1) // m) * m


def mlp_kernel(x_ref, w1_ref, b1_ref, w2_ref, b2_ref, w3_ref, b3_ref, o_ref):
    """Fused MLP forward: bf16 MXU operands, f32 accumulate / bias / ReLU."""
    # x arrives f32; cast to bf16 in-kernel (VPU has huge slack here) instead
    # of paying a separate wrapper-side XLA cast pass over HBM.
    x = x_ref[...].astype(jnp.bfloat16)                               # (tile_b, 128)
    h1 = jnp.dot(x, w1_ref[...], preferred_element_type=jnp.float32)
    h1 = jnp.maximum(h1 + b1_ref[...], 0.0)
    h2 = jnp.dot(h1.astype(jnp.bfloat16), w2_ref[...],
                 preferred_element_type=jnp.float32)
    h2 = jnp.maximum(h2 + b2_ref[...], 0.0)
    out = jnp.dot(h2.astype(jnp.bfloat16), w3_ref[...],
                  preferred_element_type=jnp.float32)
    o_ref[...] = (out + b3_ref[...]).astype(o_ref.dtype)             # lane-dense tile


def prepare_params(w1, b1, w2, b2, w3, b3):
    """One-time parameter prep (outside the hot path): cast matmul operands to
    bf16 and pad the output layer to a lane-dense (multiple of 128) width."""
    num_outputs = w3.shape[1]
    out_pad = _round_up(num_outputs, 128)
    w3p = jnp.pad(w3, ((0, 0), (0, out_pad - num_outputs)))
    b3p = jnp.pad(b3, ((0, 0), (0, out_pad - num_outputs)))
    return (w1.astype(jnp.bfloat16), b1.astype(jnp.float32),
            w2.astype(jnp.bfloat16), b2.astype(jnp.float32),
            w3p.astype(jnp.bfloat16), b3p.astype(jnp.float32))


@functools.partial(jax.jit, static_argnames=("num_outputs",))
def classification_forward(x, w1, b1, w2, b2, w3p, b3p, *, num_outputs):
    batch, num_inputs = x.shape
    num_hiddens = w1.shape[1]
    out_pad = w3p.shape[1]

    # Batch-dependent tiling: one tile for small batches (no serial grid
    # overhead on single-TC v5e/v6e), two "parallel" tiles only when the batch
    # is large enough that both v7x TensorCores get real work. Pad rows only
    # to the sublane multiple (8) per tile.
    n_tiles = 1 if batch <= 256 else 2
    tile_b = _round_up(pl.cdiv(batch, n_tiles), 8)
    padded_batch = n_tiles * tile_b
    if padded_batch != batch:
        x = jnp.pad(x, ((0, padded_batch - batch), (0, 0)))

    const2d = lambda i: (0, 0)   # weights/biases: same block for every grid step

    out = pl.pallas_call(
        mlp_kernel,
        out_shape=jax.ShapeDtypeStruct((padded_batch, out_pad), jnp.float32),
        grid_spec=pl.GridSpec(
            grid=(n_tiles,),
            in_specs=[
                pl.BlockSpec((tile_b, num_inputs), lambda i: (i, 0)),   # x tile (f32)
                pl.BlockSpec((num_inputs, num_hiddens), const2d),       # W1 (bf16)
                pl.BlockSpec((1, num_hiddens), const2d),                # b1 (f32)
                pl.BlockSpec((num_hiddens, num_hiddens), const2d),      # W2 (bf16)
                pl.BlockSpec((1, num_hiddens), const2d),                # b2 (f32)
                pl.BlockSpec((num_hiddens, out_pad), const2d),          # W3 padded (bf16)
                pl.BlockSpec((1, out_pad), const2d),                    # b3 padded (f32)
            ],
            out_specs=pl.BlockSpec((tile_b, out_pad), lambda i: (i, 0)),
        ),
        compiler_params=pltpu.CompilerParams(
            dimension_semantics=("parallel",),
        ),
    )(x, w1, b1, w2, b2, w3p, b3p)

    return out[:batch, :num_outputs]


def init_linear_params(key, fan_in, fan_out):
    """Mimic torch.nn.Linear default init: U(-1/sqrt(fan_in), 1/sqrt(fan_in))."""
    kw, kb = jax.random.split(key)
    bound = 1.0 / jnp.sqrt(float(fan_in))
    w = jax.random.uniform(kw, (fan_in, fan_out), jnp.float32, -bound, bound)
    b = jax.random.uniform(kb, (1, fan_out), jnp.float32, -bound, bound)
    return w, b


if __name__ == "__main__":
    key = jax.random.PRNGKey(0)
    kx, k1, k2, k3 = jax.random.split(key, 4)

    x = jax.random.normal(kx, (BATCH, NUM_INPUTS), jnp.float32)
    w1, b1 = init_linear_params(k1, NUM_INPUTS, NUM_HIDDENS)
    w2, b2 = init_linear_params(k2, NUM_HIDDENS, NUM_HIDDENS)
    w3, b3 = init_linear_params(k3, NUM_HIDDENS, NUM_OUTPUTS)

    # One-time parameter preparation (bf16 cast + lane-dense output padding).
    w1b, b1f, w2b, b2f, w3p, b3p = prepare_params(w1, b1, w2, b2, w3, b3)

    out = classification_forward(x, w1b, b1f, w2b, b2f, w3p, b3p,
                                 num_outputs=NUM_OUTPUTS)
    out = jax.block_until_ready(out)

    # Reference with the same bf16-operand / f32-accumulate math.
    bf = jnp.bfloat16
    ref = jnp.maximum(jnp.dot(x.astype(bf), w1.astype(bf),
                              preferred_element_type=jnp.float32) + b1, 0.0)
    ref = jnp.maximum(jnp.dot(ref.astype(bf), w2.astype(bf),
                              preferred_element_type=jnp.float32) + b2, 0.0)
    ref = jnp.dot(ref.astype(bf), w3.astype(bf),
                  preferred_element_type=jnp.float32) + b3

    assert out.shape == (BATCH, NUM_OUTPUTS)
    assert jnp.allclose(out, ref, atol=1e-2, rtol=1e-2), float(
        jnp.max(jnp.abs(out - ref)))

    print("KERNEL_OK")
</pallas_src>

<mosaic_0001>
module attributes {stable_mosaic.version = 11 : i64} {
  func.func @mlp_kernel(%arg0: i32, %arg1: memref<64x128xf32, #tpu.memory_space<vmem>>, %arg2: memref<128x128xbf16, #tpu.memory_space<vmem>>, %arg3: memref<1x128xf32, #tpu.memory_space<vmem>>, %arg4: memref<128x128xbf16, #tpu.memory_space<vmem>>, %arg5: memref<1x128xf32, #tpu.memory_space<vmem>>, %arg6: memref<128x128xbf16, #tpu.memory_space<vmem>>, %arg7: memref<1x128xf32, #tpu.memory_space<vmem>>, %arg8: memref<64x128xf32, #tpu.memory_space<vmem>>) attributes {dimension_semantics = [#tpu.dimension_semantics<parallel>], iteration_bounds = array<i64: 1>, scalar_prefetch = 0 : i64, scratch_operands = 0 : i64, tpu.core_type = #tpu.core_type<tc>, window_params = [{transform_indices = @transform_0, window_bounds = array<i64: 64, 128>}, {pipeline_mode = #tpu.pipeline_mode<synchronous>, transform_indices = @transform_1, window_bounds = array<i64: 128, 128>}, {pipeline_mode = #tpu.pipeline_mode<synchronous>, transform_indices = @transform_2, window_bounds = array<i64: 1, 128>}, {pipeline_mode = #tpu.pipeline_mode<synchronous>, transform_indices = @transform_3, window_bounds = array<i64: 128, 128>}, {pipeline_mode = #tpu.pipeline_mode<synchronous>, transform_indices = @transform_4, window_bounds = array<i64: 1, 128>}, {pipeline_mode = #tpu.pipeline_mode<synchronous>, transform_indices = @transform_5, window_bounds = array<i64: 128, 128>}, {pipeline_mode = #tpu.pipeline_mode<synchronous>, transform_indices = @transform_6, window_bounds = array<i64: 1, 128>}, {transform_indices = @transform_7, window_bounds = array<i64: 64, 128>}]} {
    %c0 = arith.constant 0 : index
    %c0_0 = arith.constant 0 : index
    %0 = vector.load %arg1[%c0, %c0_0] : memref<64x128xf32, #tpu.memory_space<vmem>>, vector<64x128xf32>
    %1 = arith.truncf %0 : vector<64x128xf32> to vector<64x128xbf16>
    %c0_1 = arith.constant 0 : index
    %c0_2 = arith.constant 0 : index
    %2 = vector.load %arg2[%c0_1, %c0_2] : memref<128x128xbf16, #tpu.memory_space<vmem>>, vector<128x128xbf16>
    %cst = arith.constant dense<0.000000e+00> : vector<64x128xf32>
    %3 = tpu.matmul %1, %2, %cst {dimension_numbers = #tpu.dot_dimension_numbers<[1], [0], [0], [1], [0, 0, 1, 1], [], []>} : vector<64x128xbf16>, vector<128x128xbf16>, vector<64x128xf32> -> vector<64x128xf32>
    %c0_3 = arith.constant 0 : index
    %c0_4 = arith.constant 0 : index
    %4 = vector.load %arg3[%c0_3, %c0_4] : memref<1x128xf32, #tpu.memory_space<vmem>>, vector<1x128xf32>
    %5 = vector.broadcast %4 : vector<1x128xf32> to vector<64x128xf32>
    %6 = arith.addf %3, %5 : vector<64x128xf32>
    %cst_5 = arith.constant 0.000000e+00 : f32
    %7 = vector.broadcast %cst_5 : f32 to vector<64x128xf32>
    %8 = arith.maximumf %6, %7 : vector<64x128xf32>
    %9 = arith.truncf %8 : vector<64x128xf32> to vector<64x128xbf16>
    %c0_6 = arith.constant 0 : index
    %c0_7 = arith.constant 0 : index
    %10 = vector.load %arg4[%c0_6, %c0_7] : memref<128x128xbf16, #tpu.memory_space<vmem>>, vector<128x128xbf16>
    %cst_8 = arith.constant dense<0.000000e+00> : vector<64x128xf32>
    %11 = tpu.matmul %9, %10, %cst_8 {dimension_numbers = #tpu.dot_dimension_numbers<[1], [0], [0], [1], [0, 0, 1, 1], [], []>} : vector<64x128xbf16>, vector<128x128xbf16>, vector<64x128xf32> -> vector<64x128xf32>
    %c0_9 = arith.constant 0 : index
    %c0_10 = arith.constant 0 : index
    %12 = vector.load %arg5[%c0_9, %c0_10] : memref<1x128xf32, #tpu.memory_space<vmem>>, vector<1x128xf32>
    %13 = vector.broadcast %12 : vector<1x128xf32> to vector<64x128xf32>
    %14 = arith.addf %11, %13 : vector<64x128xf32>
    %cst_11 = arith.constant 0.000000e+00 : f32
    %15 = vector.broadcast %cst_11 : f32 to vector<64x128xf32>
    %16 = arith.maximumf %14, %15 : vector<64x128xf32>
    %17 = arith.truncf %16 : vector<64x128xf32> to vector<64x128xbf16>
    %c0_12 = arith.constant 0 : index
    %c0_13 = arith.constant 0 : index
    %18 = vector.load %arg6[%c0_12, %c0_13] : memref<128x128xbf16, #tpu.memory_space<vmem>>, vector<128x128xbf16>
    %cst_14 = arith.constant dense<0.000000e+00> : vector<64x128xf32>
    %19 = tpu.matmul %17, %18, %cst_14 {dimension_numbers = #tpu.dot_dimension_numbers<[1], [0], [0], [1], [0, 0, 1, 1], [], []>} : vector<64x128xbf16>, vector<128x128xbf16>, vector<64x128xf32> -> vector<64x128xf32>
    %c0_15 = arith.constant 0 : index
    %c0_16 = arith.constant 0 : index
    %20 = vector.load %arg7[%c0_15, %c0_16] : memref<1x128xf32, #tpu.memory_space<vmem>>, vector<1x128xf32>
    %21 = vector.broadcast %20 : vector<1x128xf32> to vector<64x128xf32>
    %22 = arith.addf %19, %21 : vector<64x128xf32>
    %c0_17 = arith.constant 0 : index
    %c0_18 = arith.constant 0 : index
    %23 = vector.load %arg8[%c0_17, %c0_18] : memref<64x128xf32, #tpu.memory_space<vmem>>, vector<64x128xf32>
    tpu.vector_store %arg8[%c0_17, %c0_18], %22 {strides = array<i32>} : memref<64x128xf32, #tpu.memory_space<vmem>>, vector<64x128xf32>,
    return
  }
  func.func @transform_0(%arg0: i32) -> (i32, i32) {
    %c0_i32 = arith.constant 0 : i32
    %c0_i32_0 = arith.constant 0 : i32
    return %arg0, %c0_i32 : i32, i32
  }
  func.func @transform_1(%arg0: i32) -> (i32, i32) {
    %c0_i32 = arith.constant 0 : i32
    %c0_i32_0 = arith.constant 0 : i32
    %c0_i32_1 = arith.constant 0 : i32
    return %c0_i32, %c0_i32_0 : i32, i32
  }
  func.func @transform_2(%arg0: i32) -> (i32, i32) {
    %c0_i32 = arith.constant 0 : i32
    %c0_i32_0 = arith.constant 0 : i32
    %c0_i32_1 = arith.constant 0 : i32
    return %c0_i32, %c0_i32_0 : i32, i32
  }
  func.func @transform_3(%arg0: i32) -> (i32, i32) {
    %c0_i32 = arith.constant 0 : i32
    %c0_i32_0 = arith.constant 0 : i32
    %c0_i32_1 = arith.constant 0 : i32
    return %c0_i32, %c0_i32_0 : i32, i32
  }
  func.func @transform_4(%arg0: i32) -> (i32, i32) {
    %c0_i32 = arith.constant 0 : i32
    %c0_i32_0 = arith.constant 0 : i32
    %c0_i32_1 = arith.constant 0 : i32
    return %c0_i32, %c0_i32_0 : i32, i32
  }
  func.func @transform_5(%arg0: i32) -> (i32, i32) {
    %c0_i32 = arith.constant 0 : i32
    %c0_i32_0 = arith.constant 0 : i32
    %c0_i32_1 = arith.constant 0 : i32
    return %c0_i32, %c0_i32_0 : i32, i32
  }
  func.func @transform_6(%arg0: i32) -> (i32, i32) {
    %c0_i32 = arith.constant 0 : i32
    %c0_i32_0 = arith.constant 0 : i32
    %c0_i32_1 = arith.constant 0 : i32
    return %c0_i32, %c0_i32_0 : i32, i32
  }
  func.func @transform_7(%arg0: i32) -> (i32, i32) {
    %c0_i32 = arith.constant 0 : i32
    %c0_i32_0 = arith.constant 0 : i32
    return %arg0, %c0_i32 : i32, i32
  }
}

</mosaic_0001>

<llo_original>
// kernel: classification_forward.1
$region0: #{classification_forward.1}
  #allocation0 [shape = 'u32[]', space=smem, size = 0x4, offset = 0x4, fixed_abs, tag = 'smem constant byte address 0x4 - core index']
  #allocation1 [shape = 'u32[144,128]{1,0:T(1,128)}', space=vmem, size = 0x12000, scoped, tag = 'internal scratch']
  %s0 = inlined_call_operand.hbm [shape: f32[64,128], index: 0, kind: input, shape index: {}]
  %s1 = inlined_call_operand.hbm [shape: bf16[128,128], index: 1, kind: input, shape index: {}]
  %s2 = inlined_call_operand.vmem [shape: f32[1,128], index: 2, kind: input, shape index: {}]
  %s3 = inlined_call_operand.hbm [shape: bf16[128,128], index: 3, kind: input, shape index: {}]
  %s4 = inlined_call_operand.vmem [shape: f32[1,128], index: 4, kind: input, shape index: {}]
  %s5 = inlined_call_operand.hbm [shape: bf16[128,128], index: 5, kind: input, shape index: {}]
  %s6 = inlined_call_operand.vmem [shape: f32[1,128], index: 6, kind: input, shape index: {}]
  %s7 = inlined_call_operand.vmem [shape: f32[64,128], index: 7, kind: output, shape index: {}]
  %s8 = sld [smem:[#allocation0]]
  $region54: #{classification_forward.1} parent=0
    _
  %s10 = ssub.s32 1, %s8
  %s11 = scalar_select 0, %s10, %s8
  $region1: #{classification_forward.1} parent=0
    #allocation2 [shape = 'u8[32768]{0}', space=vmem, size = 0x8000, scoped, tag = 'input window, operand 0, single buffered']
    #allocation3 [shape = 's32[1]{0}', space=sflag, size = 0x4, scoped, tag = 'scoped memory for classification_forward.1']
    #allocation4 [shape = 'u8[32768]{0}', space=vmem, size = 0x8000, scoped, tag = 'input window, operand 1, single buffered']
    #allocation5 [shape = 's32[1]{0}', space=sflag, size = 0x4, scoped, tag = 'scoped memory for classification_forward.1']
    #allocation6 [shape = 'u8[32768]{0}', space=vmem, size = 0x8000, scoped, tag = 'input window, operand 3, single buffered']
    #allocation7 [shape = 'u8[32768]{0}', space=vmem, size = 0x8000, scoped, tag = 'input window, operand 5, single buffered']
    #allocation8 [shape = 's32[1]{0}', space=sflag, size = 0x4, scoped, tag = 'scoped memory for classification_forward.1']
    %12 = vsyncpa [#allocation3], 0
    %13 = vsyncpa [#allocation5], 0
    %14 = vsyncpa [#allocation8], 0
    // Predicated region
    $region2: #{classification_forward.1} parent=1 // pred_check
      _
    $region3: #{classification_forward.1} parent=1 // pred_check_branch
      %16 = sbr.rel (0) target = $region5
    $region4: #{classification_forward.1} parent=1 // pred_region
      %s18 = ssub.s32 1024, 1024
      %19 = vsyncadd [#allocation3], %s18
      %s20 = sshll.u32 [#allocation2], 4
      %s21 = int_to_ptr.vmem [resolvable:$true] %s20
      %26 = dma.hbm_to_vmem [thread:$0]  %s0, 1024, %s21, [#allocation3], 128, 128, 8
    $region5: #{classification_forward.1} parent=1 // pred_fallthru
      _
    // Predicated region
    $region6: #{classification_forward.1} parent=1 // pred_check
      _
    $region7: #{classification_forward.1} parent=1 // pred_check_branch
      %28 = sbr.rel (0) target = $region9
    $region8: #{classification_forward.1} parent=1 // pred_region
      %s30 = ssub.s32 1024, 1024
      %31 = vsyncadd [#allocation5], %s30
      %s32 = sshll.u32 [#allocation4], 4
      %s33 = int_to_ptr.vmem [resolvable:$true] %s32
      %38 = dma.hbm_to_vmem [thread:$0]  %s1, 1024, %s33, [#allocation5], 64, 64, 4
    $region9: #{classification_forward.1} parent=1 // pred_fallthru
      _
    // Predicated region
    $region10: #{classification_forward.1} parent=1 // pred_check
      _
    $region11: #{classification_forward.1} parent=1 // pred_check_branch
      %40 = sbr.rel (0) target = $region13
    $region12: #{classification_forward.1} parent=1 // pred_region
      _
    $region13: #{classification_forward.1} parent=1 // pred_fallthru
      _
    // Predicated region
    $region14: #{classification_forward.1} parent=1 // pred_check
      _
    $region15: #{classification_forward.1} parent=1 // pred_check_branch
      %42 = sbr.rel (0) target = $region17
    $region16: #{classification_forward.1} parent=1 // pred_region
      %s44 = ssub.s32 1024, 1024
      %45 = vsyncadd [#allocation5], %s44
      %s46 = sshll.u32 [#allocation6], 4
      %s47 = int_to_ptr.vmem [resolvable:$true] %s46
      %52 = dma.hbm_to_vmem [thread:$0]  %s3, 1024, %s47, [#allocation5], 64, 64, 4
    $region17: #{classification_forward.1} parent=1 // pred_fallthru
      _
    // Predicated region
    $region18: #{classification_forward.1} parent=1 // pred_check
      _
    $region19: #{classification_forward.1} parent=1 // pred_check_branch
      %54 = sbr.rel (0) target = $region21
    $region20: #{classification_forward.1} parent=1 // pred_region
      _
    $region21: #{classification_forward.1} parent=1 // pred_fallthru
      _
    // Predicated region
    $region22: #{classification_forward.1} parent=1 // pred_check
      _
    $region23: #{classification_forward.1} parent=1 // pred_check_branch
      %56 = sbr.rel (0) target = $region25
    $region24: #{classification_forward.1} parent=1 // pred_region
      %s58 = ssub.s32 1024, 1024
      %59 = vsyncadd [#allocation8], %s58
      %s60 = sshll.u32 [#allocation7], 4
      %s61 = int_to_ptr.vmem [resolvable:$true] %s60
      %66 = dma.hbm_to_vmem [thread:$0]  %s5, 1024, %s61, [#allocation8], 64, 64, 4
    $region25: #{classification_forward.1} parent=1 // pred_fallthru
      _
    // Predicated region
    $region26: #{classification_forward.1} parent=1 // pred_check
      _
    $region27: #{classification_forward.1} parent=1 // pred_check_branch
      %68 = sbr.rel (0) target = $region29
    $region28: #{classification_forward.1} parent=1 // pred_region
      _
    $region29: #{classification_forward.1} parent=1 // pred_fallthru
      _
    // Predicated region
    $region30: #{classification_forward.1} parent=1 // pred_check
      _
    $region31: #{classification_forward.1} parent=1 // pred_check_branch
      %70 = sbr.rel (0) target = $region33
    $region32: #{classification_forward.1} parent=1 // pred_region
      %71 = dma.done [#allocation3], 1024
    $region33: #{classification_forward.1} parent=1 // pred_fallthru
      _
    // Predicated region
    $region34: #{classification_forward.1} parent=1 // pred_check
      _
    $region35: #{classification_forward.1} parent=1 // pred_check_branch
      %73 = sbr.rel (0) target = $region37
    $region36: #{classification_forward.1} parent=1 // pred_region
      %74 = dma.done [#allocation5], 1024
    $region37: #{classification_forward.1} parent=1 // pred_fallthru
      _
    // Predicated region
    $region38: #{classification_forward.1} parent=1 // pred_check
      _
    $region39: #{classification_forward.1} parent=1 // pred_check_branch
      %76 = sbr.rel (0) target = $region41
    $region40: #{classification_forward.1} parent=1 // pred_region
      %77 = dma.done [#allocation5], 1024
    $region41: #{classification_forward.1} parent=1 // pred_fallthru
      _
    // Predicated region
    $region42: #{classification_forward.1} parent=1 // pred_check
      _
    $region43: #{classification_forward.1} parent=1 // pred_check_branch
      %79 = sbr.rel (0) target = $region45
    $region44: #{classification_forward.1} parent=1 // pred_region
      %80 = dma.done [#allocation8], 1024
    $region45: #{classification_forward.1} parent=1 // pred_fallthru
      _
    %v82 = vld [vmem:[#allocation2] sm:$0xff]
    %v83 = vld [vmem:[#allocation2 + $0x8] sm:$0xff]
    %v84 = vld [vmem:[#allocation2 + $0x10] sm:$0xff]
    %v85 = vld [vmem:[#allocation2 + $0x18] sm:$0xff]
    %v86 = vld [vmem:[#allocation2 + $0x20] sm:$0xff]
    %v87 = vld [vmem:[#allocation2 + $0x28] sm:$0xff]
    %v88 = vld [vmem:[#allocation2 + $0x30] sm:$0xff]
    %v89 = vld [vmem:[#allocation2 + $0x38] sm:$0xff]
    %v90 = vpack.c.bf16 %v83, %v82
    %v91 = vpack.c.bf16 %v85, %v84
    %v92 = vpack.c.bf16 %v87, %v86
    %v93 = vpack.c.bf16 %v89, %v88
    %v94 = vld [vmem:[#allocation4] sm:$0xf]
    %v95 = vld [vmem:[#allocation4 + $0x4] sm:$0xf]
    %v96 = vld [vmem:[#allocation4 + $0x8] sm:$0xf]
    %v97 = vld [vmem:[#allocation4 + $0xc] sm:$0xf]
    %v98 = vld [vmem:[#allocation4 + $0x10] sm:$0xf]
    %v99 = vld [vmem:[#allocation4 + $0x14] sm:$0xf]
    %v100 = vld [vmem:[#allocation4 + $0x18] sm:$0xf]
    %v101 = vld [vmem:[#allocation4 + $0x1c] sm:$0xf]
    %v102 = vld [vmem:[#allocation4 + $0x20] sm:$0xf]
    %v103 = vld [vmem:[#allocation4 + $0x24] sm:$0xf]
    %v104 = vld [vmem:[#allocation4 + $0x28] sm:$0xf]
    %v105 = vld [vmem:[#allocation4 + $0x2c] sm:$0xf]
    %v106 = vld [vmem:[#allocation4 + $0x30] sm:$0xf]
    %v107 = vld [vmem:[#allocation4 + $0x34] sm:$0xf]
    %v108 = vld [vmem:[#allocation4 + $0x38] sm:$0xf]
    %v109 = vld [vmem:[#allocation4 + $0x3c] sm:$0xf]
    %v110 = vld [vmem:[%s2] sm:$0x1]
    %v112 = vlaneseq
    %v113 = vshrl.u32 %v112, 7
    %v114 = vsub.s32 0, %v113
    %v115 = vrot.slane %v110, %v114
    %v133 = vunpack.c.l.b16 %v94
    %v134 = vunpack.c.l.b16 %v95
    %v135 = vunpack.c.l.b16 %v96
    %v136 = vunpack.c.l.b16 %v97
    %v137 = vunpack.c.l.b16 %v98
    %v138 = vunpack.c.l.b16 %v99
    %v139 = vunpack.c.l.b16 %v100
    %v140 = vunpack.c.l.b16 %v101
    %v141 = vunpack.c.l.b16 %v102
    %v142 = vunpack.c.l.b16 %v103
    %v143 = vunpack.c.l.b16 %v104
    %v144 = vunpack.c.l.b16 %v105
    %v145 = vunpack.c.l.b16 %v106
    %v146 = vunpack.c.l.b16 %v107
    %v147 = vunpack.c.l.b16 %v108
    %v148 = vunpack.c.l.b16 %v109
    %v149 = vpack.c.b16 %v134, %v133
    %v150 = vpack.c.b16 %v136, %v135
    %v151 = vpack.c.b16 %v138, %v137
    %v152 = vpack.c.b16 %v140, %v139
    %v153 = vpack.c.b16 %v142, %v141
    %v154 = vpack.c.b16 %v144, %v143
    %v155 = vpack.c.b16 %v146, %v145
    %v156 = vpack.c.b16 %v148, %v147
    %165 = vmatprep.subr.bf16.mxu0 0
    %166 = vmatpush1.bf16.msra.mxu0 %v156
    %167 = vmatprep.subr.bf16.mxu0 0
    %168 = vmatpush1.bf16.msra.mxu0 %v155
    %169 = vmatprep.subr.bf16.mxu0 0
    %170 = vmatpush1.bf16.msra.mxu0 %v154
    %171 = vmatprep.subr.bf16.mxu0 0
    %172 = vmatpush1.bf16.msra.mxu0 %v153
    %173 = vmatprep.subr.bf16.mxu0 0
    %174 = vmatpush1.bf16.msra.mxu0 %v152
    %175 = vmatprep.subr.bf16.mxu0 0
    %176 = vmatpush1.bf16.msra.mxu0 %v151
    %177 = vmatprep.subr.bf16.mxu0 0
    %178 = vmatpush1.bf16.msra.mxu0 %v150
    %179 = vmatprep.subr.bf16.mxu0 0
    %180 = vmatpush1.bf16.msra.mxu0 %v149
    %181 = vmatprep.subr.bf16.mxu0 0
    %182 = vmatpush2.bf16.msra.mxu0 0
    %183 = vmatprep.subr.bf16.mxu0 0
    %184 = vmatpush2.bf16.msra.mxu0 0
    %185 = vmatprep.subr.bf16.mxu0 0
    %186 = vmatpush2.bf16.msra.mxu0 0
    %187 = vmatprep.subr.bf16.mxu0 0
    %188 = vmatpush2.bf16.msra.mxu0 0
    %189 = vmatprep.subr.bf16.mxu0 0
    %190 = vmatpush2.bf16.msra.mxu0 0
    %191 = vmatprep.subr.bf16.mxu0 0
    %192 = vmatpush2.bf16.msra.mxu0 0
    %193 = vmatprep.subr.bf16.mxu0 0
    %194 = vmatpush2.bf16.msra.mxu0 0
    %195 = vmatprep.subr.bf16.mxu0 0
    %196 = vmatpush2.bf16.msra.mxu0 0
    %197 = vmatprep.mubr.bf16.mxu0 0
    %198 = vmatmul.mubr.bf16.gmra.mxu0 %v90
    %v199 = vpop.f32.mrf.mxu0
    %v200 = vadd.f32 %v115, %v199
    %v201 = vpop.f32.mrf.mxu0
    %v202 = vpop.f32.mrf.mxu0
    %v203 = vadd.f32 %v115, %v202
    %v204 = vpop.f32.mrf.mxu0
    %205 = vmatprep.mubr.bf16.mxu0 0
    %206 = vmatmul.mubr.bf16.gmra.mxu0 %v91
    %v207 = vpop.f32.mrf.mxu0
    %v208 = vadd.f32 %v115, %v207
    %v209 = vpop.f32.mrf.mxu0
    %v210 = vpop.f32.mrf.mxu0
    %v211 = vadd.f32 %v115, %v210
    %v212 = vpop.f32.mrf.mxu0
    %213 = vmatprep.mubr.bf16.mxu0 0
    %214 = vmatmul.mubr.bf16.gmra.mxu0 %v92
    %v215 = vpop.f32.mrf.mxu0
    %v216 = vadd.f32 %v115, %v215
    %v217 = vpop.f32.mrf.mxu0
    %v218 = vpop.f32.mrf.mxu0
    %v219 = vadd.f32 %v115, %v218
    %v220 = vpop.f32.mrf.mxu0
    %221 = vmatprep.mubr.bf16.mxu0 0
    %222 = vmatmul.mubr.bf16.gmra.mxu0 %v93
    %v223 = vpop.f32.mrf.mxu0
    %v224 = vadd.f32 %v115, %v223
    %v225 = vpop.f32.mrf.mxu0
    %v226 = vpop.f32.mrf.mxu0
    %v227 = vadd.f32 %v115, %v226
    %v228 = vpop.f32.mrf.mxu0
    %229 = vdwg.mxu0
    %v230 = vmax.f32 %v200, 0.0
    %v231 = vmax.f32 %v203, 0.0
    %v232 = vmax.f32 %v208, 0.0
    %v233 = vmax.f32 %v211, 0.0
    %v234 = vmax.f32 %v216, 0.0
    %v235 = vmax.f32 %v219, 0.0
    %v236 = vmax.f32 %v224, 0.0
    %v237 = vmax.f32 %v227, 0.0
    %v238 = vpack.c.bf16 %v231, %v230
    %v239 = vpack.c.bf16 %v233, %v232
    %v240 = vpack.c.bf16 %v235, %v234
    %v241 = vpack.c.bf16 %v237, %v236
    %v242 = vld [vmem:[#allocation6] sm:$0xf]
    %v243 = vld [vmem:[#allocation6 + $0x4] sm:$0xf]
    %v244 = vld [vmem:[#allocation6 + $0x8] sm:$0xf]
    %v245 = vld [vmem:[#allocation6 + $0xc] sm:$0xf]
    %v246 = vld [vmem:[#allocation6 + $0x10] sm:$0xf]
    %v247 = vld [vmem:[#allocation6 + $0x14] sm:$0xf]
    %v248 = vld [vmem:[#allocation6 + $0x18] sm:$0xf]
    %v249 = vld [vmem:[#allocation6 + $0x1c] sm:$0xf]
    %v250 = vld [vmem:[#allocation6 + $0x20] sm:$0xf]
    %v251 = vld [vmem:[#allocation6 + $0x24] sm:$0xf]
    %v252 = vld [vmem:[#allocation6 + $0x28] sm:$0xf]
    %v253 = vld [vmem:[#allocation6 + $0x2c] sm:$0xf]
    %v254 = vld [vmem:[#allocation6 + $0x30] sm:$0xf]
    %v255 = vld [vmem:[#allocation6 + $0x34] sm:$0xf]
    %v256 = vld [vmem:[#allocation6 + $0x38] sm:$0xf]
    %v257 = vld [vmem:[#allocation6 + $0x3c] sm:$0xf]
    %v258 = vld [vmem:[%s4] sm:$0x1]
    %v260 = vlaneseq
    %v261 = vshrl.u32 %v260, 7
    %v262 = vsub.s32 0, %v261
    %v263 = vrot.slane %v258, %v262
    %v281 = vunpack.c.l.b16 %v242
    %v282 = vunpack.c.l.b16 %v243
    %v283 = vunpack.c.l.b16 %v244
    %v284 = vunpack.c.l.b16 %v245
    %v285 = vunpack.c.l.b16 %v246
    %v286 = vunpack.c.l.b16 %v247
    %v287 = vunpack.c.l.b16 %v248
    %v288 = vunpack.c.l.b16 %v249
    %v289 = vunpack.c.l.b16 %v250
    %v290 = vunpack.c.l.b16 %v251
    %v291 = vunpack.c.l.b16 %v252
    %v292 = vunpack.c.l.b16 %v253
    %v293 = vunpack.c.l.b16 %v254
    %v294 = vunpack.c.l.b16 %v255
    %v295 = vunpack.c.l.b16 %v256
    %v296 = vunpack.c.l.b16 %v257
    %v297 = vpack.c.b16 %v282, %v281
    %v298 = vpack.c.b16 %v284, %v283
    %v299 = vpack.c.b16 %v286, %v285
    %v300 = vpack.c.b16 %v288, %v287
    %v301 = vpack.c.b16 %v290, %v289
    %v302 = vpack.c.b16 %v292, %v291
    %v303 = vpack.c.b16 %v294, %v293
    %v304 = vpack.c.b16 %v296, %v295
    %313 = vmatprep.subr.bf16.mxu0 0
    %314 = vmatpush1.bf16.msra.mxu0 %v304
    %315 = vmatprep.subr.bf16.mxu0 0
    %316 = vmatpush1.bf16.msra.mxu0 %v303
    %317 = vmatprep.subr.bf16.mxu0 0
    %318 = vmatpush1.bf16.msra.mxu0 %v302
    %319 = vmatprep.subr.bf16.mxu0 0
    %320 = vmatpush1.bf16.msra.mxu0 %v301
    %321 = vmatprep.subr.bf16.mxu0 0
    %322 = vmatpush1.bf16.msra.mxu0 %v300
    %323 = vmatprep.subr.bf16.mxu0 0
    %324 = vmatpush1.bf16.msra.mxu0 %v299
    %325 = vmatprep.subr.bf16.mxu0 0
    %326 = vmatpush1.bf16.msra.mxu0 %v298
    %327 = vmatprep.subr.bf16.mxu0 0
    %328 = vmatpush1.bf16.msra.mxu0 %v297
    %329 = vmatprep.subr.bf16.mxu0 0
    %330 = vmatpush2.bf16.msra.mxu0 0
    %331 = vmatprep.subr.bf16.mxu0 0
    %332 = vmatpush2.bf16.msra.mxu0 0
    %333 = vmatprep.subr.bf16.mxu0 0
    %334 = vmatpush2.bf16.msra.mxu0 0
    %335 = vmatprep.subr.bf16.mxu0 0
    %336 = vmatpush2.bf16.msra.mxu0 0
    %337 = vmatprep.subr.bf16.mxu0 0
    %338 = vmatpush2.bf16.msra.mxu0 0
    %339 = vmatprep.subr.bf16.mxu0 0
    %340 = vmatpush2.bf16.msra.mxu0 0
    %341 = vmatprep.subr.bf16.mxu0 0
    %342 = vmatpush2.bf16.msra.mxu0 0
    %343 = vmatprep.subr.bf16.mxu0 0
    %344 = vmatpush2.bf16.msra.mxu0 0
    %345 = vmatprep.mubr.bf16.mxu0 0
    %346 = vmatmul.mubr.bf16.gmra.mxu0 %v238
    %v347 = vpop.f32.mrf.mxu0
    %v348 = vadd.f32 %v263, %v347
    %v349 = vpop.f32.mrf.mxu0
    %v350 = vpop.f32.mrf.mxu0
    %v351 = vadd.f32 %v263, %v350
    %v352 = vpop.f32.mrf.mxu0
    %353 = vmatprep.mubr.bf16.mxu0 0
    %354 = vmatmul.mubr.bf16.gmra.mxu0 %v239
    %v355 = vpop.f32.mrf.mxu0
    %v356 = vadd.f32 %v263, %v355
    %v357 = vpop.f32.mrf.mxu0
    %v358 = vpop.f32.mrf.mxu0
    %v359 = vadd.f32 %v263, %v358
    %v360 = vpop.f32.mrf.mxu0
    %361 = vmatprep.mubr.bf16.mxu0 0
    %362 = vmatmul.mubr.bf16.gmra.mxu0 %v240
    %v363 = vpop.f32.mrf.mxu0
    %v364 = vadd.f32 %v263, %v363
    %v365 = vpop.f32.mrf.mxu0
    %v366 = vpop.f32.mrf.mxu0
    %v367 = vadd.f32 %v263, %v366
    %v368 = vpop.f32.mrf.mxu0
    %369 = vmatprep.mubr.bf16.mxu0 0
    %370 = vmatmul.mubr.bf16.gmra.mxu0 %v241
    %v371 = vpop.f32.mrf.mxu0
    %v372 = vadd.f32 %v263, %v371
    %v373 = vpop.f32.mrf.mxu0
    %v374 = vpop.f32.mrf.mxu0
    %v375 = vadd.f32 %v263, %v374
    %v376 = vpop.f32.mrf.mxu0
    %377 = vdwg.mxu0
    %v378 = vmax.f32 %v348, 0.0
    %v379 = vmax.f32 %v351, 0.0
    %v380 = vmax.f32 %v356, 0.0
    %v381 = vmax.f32 %v359, 0.0
    %v382 = vmax.f32 %v364, 0.0
    %v383 = vmax.f32 %v367, 0.0
    %v384 = vmax.f32 %v372, 0.0
    %v385 = vmax.f32 %v375, 0.0
    %v386 = vpack.c.bf16 %v379, %v378
    %v387 = vpack.c.bf16 %v381, %v380
    %v388 = vpack.c.bf16 %v383, %v382
    %v389 = vpack.c.bf16 %v385, %v384
    %v390 = vld [vmem:[#allocation7] sm:$0xf]
    %v391 = vld [vmem:[#allocation7 + $0x4] sm:$0xf]
    %v392 = vld [vmem:[#allocation7 + $0x8] sm:$0xf]
    %v393 = vld [vmem:[#allocation7 + $0xc] sm:$0xf]
    %v394 = vld [vmem:[#allocation7 + $0x10] sm:$0xf]
    %v395 = vld [vmem:[#allocation7 + $0x14] sm:$0xf]
    %v396 = vld [vmem:[#allocation7 + $0x18] sm:$0xf]
    %v397 = vld [vmem:[#allocation7 + $0x1c] sm:$0xf]
    %v398 = vld [vmem:[#allocation7 + $0x20] sm:$0xf]
    %v399 = vld [vmem:[#allocation7 + $0x24] sm:$0xf]
    %v400 = vld [vmem:[#allocation7 + $0x28] sm:$0xf]
    %v401 = vld [vmem:[#allocation7 + $0x2c] sm:$0xf]
    %v402 = vld [vmem:[#allocation7 + $0x30] sm:$0xf]
    %v403 = vld [vmem:[#allocation7 + $0x34] sm:$0xf]
    %v404 = vld [vmem:[#allocation7 + $0x38] sm:$0xf]
    %v405 = vld [vmem:[#allocation7 + $0x3c] sm:$0xf]
    %v406 = vld [vmem:[%s6] sm:$0x1]
    %v408 = vlaneseq
    %v409 = vshrl.u32 %v408, 7
    %v410 = vsub.s32 0, %v409
    %v411 = vrot.slane %v406, %v410
    %v429 = vunpack.c.l.b16 %v390
    %v430 = vunpack.c.l.b16 %v391
    %v431 = vunpack.c.l.b16 %v392
    %v432 = vunpack.c.l.b16 %v393
    %v433 = vunpack.c.l.b16 %v394
    %v434 = vunpack.c.l.b16 %v395
    %v435 = vunpack.c.l.b16 %v396
    %v436 = vunpack.c.l.b16 %v397
    %v437 = vunpack.c.l.b16 %v398
    %v438 = vunpack.c.l.b16 %v399
    %v439 = vunpack.c.l.b16 %v400
    %v440 = vunpack.c.l.b16 %v401
    %v441 = vunpack.c.l.b16 %v402
    %v442 = vunpack.c.l.b16 %v403
    %v443 = vunpack.c.l.b16 %v404
    %v444 = vunpack.c.l.b16 %v405
    %v445 = vpack.c.b16 %v430, %v429
    %v446 = vpack.c.b16 %v432, %v431
    %v447 = vpack.c.b16 %v434, %v433
    %v448 = vpack.c.b16 %v436, %v435
    %v449 = vpack.c.b16 %v438, %v437
    %v450 = vpack.c.b16 %v440, %v439
    %v451 = vpack.c.b16 %v442, %v441
    %v452 = vpack.c.b16 %v444, %v443
    %461 = vmatprep.subr.bf16.mxu0 0
    %462 = vmatpush1.bf16.msra.mxu0 %v452
    %463 = vmatprep.subr.bf16.mxu0 0
    %464 = vmatpush1.bf16.msra.mxu0 %v451
    %465 = vmatprep.subr.bf16.mxu0 0
    %466 = vmatpush1.bf16.msra.mxu0 %v450
    %467 = vmatprep.subr.bf16.mxu0 0
    %468 = vmatpush1.bf16.msra.mxu0 %v449
    %469 = vmatprep.subr.bf16.mxu0 0
    %470 = vmatpush1.bf16.msra.mxu0 %v448
    %471 = vmatprep.subr.bf16.mxu0 0
    %472 = vmatpush1.bf16.msra.mxu0 %v447
    %473 = vmatprep.subr.bf16.mxu0 0
    %474 = vmatpush1.bf16.msra.mxu0 %v446
    %475 = vmatprep.subr.bf16.mxu0 0
    %476 = vmatpush1.bf16.msra.mxu0 %v445
    %477 = vmatprep.subr.bf16.mxu0 0
    %478 = vmatpush2.bf16.msra.mxu0 0
    %479 = vmatprep.subr.bf16.mxu0 0
    %480 = vmatpush2.bf16.msra.mxu0 0
    %481 = vmatprep.subr.bf16.mxu0 0
    %482 = vmatpush2.bf16.msra.mxu0 0
    %483 = vmatprep.subr.bf16.mxu0 0
    %484 = vmatpush2.bf16.msra.mxu0 0
    %485 = vmatprep.subr.bf16.mxu0 0
    %486 = vmatpush2.bf16.msra.mxu0 0
    %487 = vmatprep.subr.bf16.mxu0 0
    %488 = vmatpush2.bf16.msra.mxu0 0
    %489 = vmatprep.subr.bf16.mxu0 0
    %490 = vmatpush2.bf16.msra.mxu0 0
    %491 = vmatprep.subr.bf16.mxu0 0
    %492 = vmatpush2.bf16.msra.mxu0 0
    %493 = vmatprep.mubr.bf16.mxu0 0
    %494 = vmatmul.mubr.bf16.gmra.mxu0 %v386
    %v495 = vpop.f32.mrf.mxu0
    %v496 = vadd.f32 %v411, %v495
    %v497 = vpop.f32.mrf.mxu0
    %v498 = vpop.f32.mrf.mxu0
    %v499 = vadd.f32 %v411, %v498
    %v500 = vpop.f32.mrf.mxu0
    %501 = vmatprep.mubr.bf16.mxu0 0
    %502 = vmatmul.mubr.bf16.gmra.mxu0 %v387
    %v503 = vpop.f32.mrf.mxu0
    %v504 = vadd.f32 %v411, %v503
    %v505 = vpop.f32.mrf.mxu0
    %v506 = vpop.f32.mrf.mxu0
    %v507 = vadd.f32 %v411, %v506
    %v508 = vpop.f32.mrf.mxu0
    %509 = vmatprep.mubr.bf16.mxu0 0
    %510 = vmatmul.mubr.bf16.gmra.mxu0 %v388
    %v511 = vpop.f32.mrf.mxu0
    %v512 = vadd.f32 %v411, %v511
    %v513 = vpop.f32.mrf.mxu0
    %v514 = vpop.f32.mrf.mxu0
    %v515 = vadd.f32 %v411, %v514
    %v516 = vpop.f32.mrf.mxu0
    %517 = vmatprep.mubr.bf16.mxu0 0
    %518 = vmatmul.mubr.bf16.gmra.mxu0 %v389
    %v519 = vpop.f32.mrf.mxu0
    %v520 = vadd.f32 %v411, %v519
    %v521 = vpop.f32.mrf.mxu0
    %v522 = vpop.f32.mrf.mxu0
    %v523 = vadd.f32 %v411, %v522
    %v524 = vpop.f32.mrf.mxu0
    %525 = vdwg.mxu0
    %526 = vst [vmem:[%s7] sm:$0xff] %v496
    %527 = vst [vmem:[%s7 + $0x8] sm:$0xff] %v499
    %528 = vst [vmem:[%s7 + $0x10] sm:$0xff] %v504
    %529 = vst [vmem:[%s7 + $0x18] sm:$0xff] %v507
    %530 = vst [vmem:[%s7 + $0x20] sm:$0xff] %v512
    %531 = vst [vmem:[%s7 + $0x28] sm:$0xff] %v515
    %532 = vst [vmem:[%s7 + $0x30] sm:$0xff] %v520
    %533 = vst [vmem:[%s7 + $0x38] sm:$0xff] %v523
    // Predicated region
    $region46: #{classification_forward.1} parent=1 // pred_check
      _
    $region47: #{classification_forward.1} parent=1 // pred_check_branch
      %535 = sbr.rel (0) target = $region49
    $region48: #{classification_forward.1} parent=1 // pred_region
      _
    $region49: #{classification_forward.1} parent=1 // pred_fallthru
      _
    // Predicated region
    $region50: #{classification_forward.1} parent=1 // pred_check
      _
    $region51: #{classification_forward.1} parent=1 // pred_check_branch
      %537 = sbr.rel (0) target = $region53
    $region52: #{classification_forward.1} parent=1 // pred_region
      _
    $region53: #{classification_forward.1} parent=1 // pred_fallthru
      _
    %538 = vsyncpa [#allocation3], 1
    %539 = vsyncpa [#allocation5], 1
    %540 = vsyncpa [#allocation8], 1

</llo_original>
